<compile_context>
chip_gen: v6e
topology: v6e:2x2x1
jax: 0.10.0
libtpu: 0.0.40
codegen_flags: <defaults>
</compile_context>

<pallas_src>
import jax
import jax.numpy as jnp
from jax.experimental import pallas as pl
from jax.experimental.pallas import tpu as pltpu


def _test_loss_kernel(params_ref, w_ref, close_ref,
                      pvh_ref, rew_ref, cr_ref, sr_ref, to_ref, loss_ref):
    commission_ratio = params_ref[0]
    interest_rate = params_ref[1]

    w = w_ref[...]           # [B, A+1, T]  portfolio weights (A-row 0 = cash)
    close = close_ref[...]   # [B, A, T]    per-asset close price relatives
    B, A1, T = w_ref.shape

    w_cash = w[:, 0, :]                     # [B, T]  (cash price relative == 1)
    w_assets = w[:, 1:, :]                  # [B, A, T]
    er_assets = w_assets * close            # [B, A, T] element rewards (assets)

    # rewards = matmul(w, close_price): dot over cash + assets.
    # A+1 = 5 is tiny -> keep on VPU with sublane adds, skip the MXU.
    rewards_raw = w_cash + jnp.sum(er_assets, axis=1)               # [B, T]

    # interest: sum of negative element rewards * interest_rate
    interest = (jnp.minimum(w_cash, 0.0)
                + jnp.sum(jnp.minimum(er_assets, 0.0), axis=1)) * interest_rate

    # future_omega = element_reward / rewards (true divide, matches torch)
    fo_cash = w_cash / rewards_raw                                  # [B, T]
    fo_assets = er_assets / rewards_raw[:, None, :]                 # [B, A, T]

    # Shift future_omega one step forward along T so step t compares
    # future_omega[t-1] against w[t]; the wrapped t==0 slot is masked below.
    fo_cash_prev = pltpu.roll(fo_cash, 1, 1)                        # lane roll
    fo_assets_prev = pltpu.roll(fo_assets, 1, 2)                    # lane roll

    t_idx = jax.lax.broadcasted_iota(jnp.int32, (B, T), 1)
    diff = (jnp.abs(fo_cash_prev - w_cash)
            + jnp.sum(jnp.abs(fo_assets_prev - w_assets), axis=1))  # [B, T]
    diff = jnp.where(t_idx >= 1, diff, 0.0)   # diff[:, t] = turnover cost[t-1]

    pure_pc = 1.0 - diff * commission_ratio                          # [B, T]
    rewards = rewards_raw * pure_pc + interest      # tst_pc_array   [B, T]

    # ---------------- fused scalar statistics ----------------
    def sum_all(x):    # [*, T] -> (1, 1)
        return jnp.sum(jnp.sum(x, axis=1, keepdims=True), axis=0, keepdims=True)

    def max_all(x):
        return jnp.max(jnp.max(x, axis=1, keepdims=True), axis=0, keepdims=True)

    n = float(B * T)

    # SR = mean(r - 1) / std(r - 1), torch-default unbiased std (ddof=1).
    sr_rew = rewards - 1.0
    mean11 = sum_all(sr_rew) / n
    var11 = sum_all((sr_rew - mean11) ** 2) / (n - 1.0)
    sr11 = mean11 / jnp.sqrt(var11)

    # TO = mean of the (B, T-1) turnover costs (diff[:, 0] is exactly 0).
    to11 = sum_all(diff) / float(B * (T - 1))

    # portfolio_value_history = cumprod(rewards, axis=T) via a Hillis-Steele
    # inclusive scan: log2(T) steps of (roll + iota mask + multiply).
    pv = rewards
    s = 1
    while s < T:
        pv = pv * jnp.where(t_idx >= s, pltpu.roll(pv, s, 1), 1.0)
        s *= 2

    # TODO(synk): max_drawdown() is referenced but not defined in the original
    # module; using the standard cumprod / running-max drawdown reduced to a scalar.
    rm = pv
    s = 1
    while s < T:
        rm = jnp.where(t_idx >= s, jnp.maximum(rm, pltpu.roll(rm, s, 1)), rm)
        s *= 2
    mdd11 = max_all(1.0 - pv / rm)                                  # (1, 1)

    sn_b1 = pv[:, T - 1:T]                  # SN = prod over T       [B, 1]
    cr_b1 = sn_b1 / mdd11                   # CR = SN / MDD          [B, 1]

    # batch_loss = -log(portfolio_value_history[-1]) (LAST batch row, as in the
    # reference's [-1] indexing); loss = its mean over T.
    loss11 = sum_all(-jnp.log(pv[B - 1:B, :])) / float(T)

    pvh_ref[...] = pv                       # portfolio value history [B, T]
    rew_ref[...] = rewards                  # rewards / tst_pc_array  [B, T]
    cr_ref[...] = cr_b1                     # [B, 1]
    sr_ref[...] = sr11                      # (1, 1)
    to_ref[...] = to11                      # (1, 1)
    loss_ref[...] = loss11                  # (1, 1)


@jax.jit
def _test_loss_impl(w, y, params):
    B, T, _, A1 = w.shape                                   # A1 = A + 1

    # Layout change (perf review): T on lanes, assets on sublanes.  The
    # feature-0 / head-0 slices fuse with these transposes into single copies
    # under jit, so no extra HBM materialization beyond the (needed) transpose.
    w_t = jnp.transpose(w[:, :, 0, :], (0, 2, 1)).astype(jnp.float32)      # [B, A+1, T]
    close_t = jnp.transpose(y[:, :, :, 0], (0, 2, 1)).astype(jnp.float32)  # [B, A, T]

    out_shapes = (
        jax.ShapeDtypeStruct((B, T), jnp.float32),   # portfolio value history
        jax.ShapeDtypeStruct((B, T), jnp.float32),   # rewards / tst_pc_array
        jax.ShapeDtypeStruct((B, 1), jnp.float32),   # CR
        jax.ShapeDtypeStruct((1, 1), jnp.float32),   # SR
        jax.ShapeDtypeStruct((1, 1), jnp.float32),   # TO
        jax.ShapeDtypeStruct((1, 1), jnp.float32),   # loss
    )
    vmem = pl.BlockSpec(memory_space=pltpu.MemorySpace.VMEM)

    pvh, rewards, cr_b, sr, to, loss = pl.pallas_call(
        _test_loss_kernel,
        out_shape=out_shapes,
        in_specs=[pl.BlockSpec(memory_space=pltpu.MemorySpace.SMEM),  # params
                  vmem,                                               # w
                  vmem],                                              # close
        out_specs=(vmem, vmem, vmem, vmem, vmem, vmem),
        compiler_params=pltpu.CompilerParams(
            # Explicit budget: portable to v5e's 16 MiB scoped-VMEM default.
            vmem_limit_bytes=16 * 1024 * 1024),
    )(params, w_t, close_t)

    # Matches torch return tuple:
    # (loss, portfolio_value_history, rewards.squeeze(), SR, CR, tst_pc_array, TO)
    return (loss[0, 0], pvh, rewards, sr[0, 0], cr_b[:, 0], rewards, to[0, 0])


def test_loss_forward(w, y, commission_ratio=0.0025, interest_rate=0.02 / 250):
    """JAX/Pallas equivalent of Test_Loss.forward(w, y)."""
    params = jnp.asarray([commission_ratio, interest_rate], dtype=jnp.float32)
    return _test_loss_impl(w, y, params)


if __name__ == "__main__":
    key = jax.random.PRNGKey(0)
    kw, ky = jax.random.split(key)

    B, T, A, F = 2, 8, 4, 3                # assets A -> A+1 = 5 incl. cash
    # Deterministic synthetic inputs consistent with the module's semantics:
    # portfolio weights (softmax over cash+assets) and price relatives near 1.
    w_logits = jax.random.normal(kw, (B, T, 1, A + 1), jnp.float32)
    w = jax.nn.softmax(w_logits, axis=-1)                               # [B, T, 1, A+1]
    y = 1.0 + 0.05 * jax.random.normal(ky, (B, T, A, F), jnp.float32)   # [B, T, A, F]

    outs = test_loss_forward(w, y, commission_ratio=0.0025, interest_rate=0.02 / 250)
    jax.block_until_ready(outs)
    print("KERNEL_OK")
</pallas_src>

<mosaic_0001>
module attributes {stable_mosaic.version = 11 : i64} {
  func.func @_test_loss_kernel(%arg0: memref<2xf32, #tpu.memory_space<smem>>, %arg1: memref<2x5x8xf32, #tpu.memory_space<vmem>>, %arg2: memref<2x4x8xf32, #tpu.memory_space<vmem>>, %arg3: memref<2x8xf32, #tpu.memory_space<vmem>>, %arg4: memref<2x8xf32, #tpu.memory_space<vmem>>, %arg5: memref<2x1xf32, #tpu.memory_space<vmem>>, %arg6: memref<1x1xf32, #tpu.memory_space<vmem>>, %arg7: memref<1x1xf32, #tpu.memory_space<vmem>>, %arg8: memref<1x1xf32, #tpu.memory_space<vmem>>) attributes {dimension_semantics = [], scalar_prefetch = 0 : i64, scratch_operands = 0 : i64, tpu.core_type = #tpu.core_type<tc>} {
    %c0 = arith.constant 0 : index
    %0 = memref.load %arg0[%c0] : memref<2xf32, #tpu.memory_space<smem>>
    %c1 = arith.constant 1 : index
    %1 = memref.load %arg0[%c1] : memref<2xf32, #tpu.memory_space<smem>>
    %c0_0 = arith.constant 0 : index
    %c0_1 = arith.constant 0 : index
    %c0_2 = arith.constant 0 : index
    %2 = vector.load %arg1[%c0_0, %c0_1, %c0_2] : memref<2x5x8xf32, #tpu.memory_space<vmem>>, vector<2x5x8xf32>
    %c0_3 = arith.constant 0 : index
    %c0_4 = arith.constant 0 : index
    %c0_5 = arith.constant 0 : index
    %3 = vector.load %arg2[%c0_3, %c0_4, %c0_5] : memref<2x4x8xf32, #tpu.memory_space<vmem>>, vector<2x4x8xf32>
    %4 = vector.extract_strided_slice %2 {offsets = [0, 0, 0], sizes = [2, 1, 8], strides = [1, 1, 1]} : vector<2x5x8xf32> to vector<2x1x8xf32>
    %5 = vector.shape_cast %4 : vector<2x1x8xf32> to vector<2x8xf32>
    %6 = vector.extract_strided_slice %2 {offsets = [0, 1, 0], sizes = [2, 4, 8], strides = [1, 1, 1]} : vector<2x5x8xf32> to vector<2x4x8xf32>
    %7 = arith.mulf %6, %3 : vector<2x4x8xf32>
    %cst = arith.constant dense<0.000000e+00> : vector<2x8xf32>
    %8 = vector.multi_reduction <add>, %7, %cst [1] : vector<2x4x8xf32> to vector<2x8xf32>
    %9 = arith.addf %5, %8 : vector<2x8xf32>
    %cst_6 = arith.constant 0.000000e+00 : f32
    %10 = vector.broadcast %cst_6 : f32 to vector<2x8xf32>
    %11 = arith.minimumf %5, %10 : vector<2x8xf32>
    %cst_7 = arith.constant 0.000000e+00 : f32
    %12 = vector.broadcast %cst_7 : f32 to vector<2x4x8xf32>
    %13 = arith.minimumf %7, %12 : vector<2x4x8xf32>
    %cst_8 = arith.constant dense<0.000000e+00> : vector<2x8xf32>
    %14 = vector.multi_reduction <add>, %13, %cst_8 [1] : vector<2x4x8xf32> to vector<2x8xf32>
    %15 = arith.addf %11, %14 : vector<2x8xf32>
    %16 = vector.broadcast %1 : f32 to vector<2x8xf32>
    %17 = arith.mulf %15, %16 : vector<2x8xf32>
    %18 = arith.divf %5, %9 : vector<2x8xf32>
    %19 = vector.shape_cast %9 : vector<2x8xf32> to vector<2x1x8xf32>
    %20 = vector.broadcast %19 : vector<2x1x8xf32> to vector<2x4x8xf32>
    %21 = arith.divf %7, %20 : vector<2x4x8xf32>
    %c1_i32 = arith.constant 1 : i32
    %22 = tpu.dynamic_rotate %18 by %c1_i32 dim 1 : vector<2x8xf32>, i32 -> vector<2x8xf32>
    %c1_i32_9 = arith.constant 1 : i32
    %23 = tpu.dynamic_rotate %21 by %c1_i32_9 dim 2 : vector<2x4x8xf32>, i32 -> vector<2x4x8xf32>
    %24 = tpu.iota {dimensions = array<i32: 1>} : vector<2x8xi32>
    %25 = arith.subf %22, %5 : vector<2x8xf32>
    %26 = math.absf %25 : vector<2x8xf32>
    %27 = arith.subf %23, %6 : vector<2x4x8xf32>
    %28 = math.absf %27 : vector<2x4x8xf32>
    %cst_10 = arith.constant dense<0.000000e+00> : vector<2x8xf32>
    %29 = vector.multi_reduction <add>, %28, %cst_10 [1] : vector<2x4x8xf32> to vector<2x8xf32>
    %30 = arith.addf %26, %29 : vector<2x8xf32>
    %c1_i32_11 = arith.constant 1 : i32
    %31 = vector.broadcast %c1_i32_11 : i32 to vector<2x8xi32>
    %32 = arith.cmpi sge, %24, %31 : vector<2x8xi32>
    %cst_12 = arith.constant 0.000000e+00 : f32
    %33 = vector.broadcast %cst_12 : f32 to vector<2x8xf32>
    %34 = arith.select %32, %30, %33 : vector<2x8xi1>, vector<2x8xf32>
    %35 = vector.broadcast %0 : f32 to vector<2x8xf32>
    %36 = arith.mulf %34, %35 : vector<2x8xf32>
    %cst_13 = arith.constant 1.000000e+00 : f32
    %37 = vector.broadcast %cst_13 : f32 to vector<2x8xf32>
    %38 = arith.subf %37, %36 : vector<2x8xf32>
    %39 = arith.mulf %9, %38 : vector<2x8xf32>
    %40 = arith.addf %39, %17 : vector<2x8xf32>
    %cst_14 = arith.constant 1.000000e+00 : f32
    %41 = vector.broadcast %cst_14 : f32 to vector<2x8xf32>
    %42 = arith.subf %40, %41 : vector<2x8xf32>
    %cst_15 = arith.constant dense<0.000000e+00> : vector<2xf32>
    %43 = vector.multi_reduction <add>, %42, %cst_15 [1] : vector<2x8xf32> to vector<2xf32>
    %44 = vector.shape_cast %43 : vector<2xf32> to vector<2x1xf32>
    %cst_16 = arith.constant dense<0.000000e+00> : vector<1xf32>
    %45 = vector.multi_reduction <add>, %44, %cst_16 [0] : vector<2x1xf32> to vector<1xf32>
    %46 = vector.shape_cast %45 : vector<1xf32> to vector<1x1xf32>
    %cst_17 = arith.constant 1.600000e+01 : f32
    %47 = vector.broadcast %cst_17 : f32 to vector<1x1xf32>
    %48 = arith.divf %46, %47 : vector<1x1xf32>
    %49 = vector.broadcast %48 : vector<1x1xf32> to vector<2x8xf32>
    %50 = arith.subf %42, %49 : vector<2x8xf32>
    %51 = arith.mulf %50, %50 : vector<2x8xf32>
    %cst_18 = arith.constant dense<0.000000e+00> : vector<2xf32>
    %52 = vector.multi_reduction <add>, %51, %cst_18 [1] : vector<2x8xf32> to vector<2xf32>
    %53 = vector.shape_cast %52 : vector<2xf32> to vector<2x1xf32>
    %cst_19 = arith.constant dense<0.000000e+00> : vector<1xf32>
    %54 = vector.multi_reduction <add>, %53, %cst_19 [0] : vector<2x1xf32> to vector<1xf32>
    %55 = vector.shape_cast %54 : vector<1xf32> to vector<1x1xf32>
    %cst_20 = arith.constant 1.500000e+01 : f32
    %56 = vector.broadcast %cst_20 : f32 to vector<1x1xf32>
    %57 = arith.divf %55, %56 : vector<1x1xf32>
    %58 = math.sqrt %57 : vector<1x1xf32>
    %59 = arith.divf %48, %58 : vector<1x1xf32>
    %cst_21 = arith.constant dense<0.000000e+00> : vector<2xf32>
    %60 = vector.multi_reduction <add>, %34, %cst_21 [1] : vector<2x8xf32> to vector<2xf32>
    %61 = vector.shape_cast %60 : vector<2xf32> to vector<2x1xf32>
    %cst_22 = arith.constant dense<0.000000e+00> : vector<1xf32>
    %62 = vector.multi_reduction <add>, %61, %cst_22 [0] : vector<2x1xf32> to vector<1xf32>
    %63 = vector.shape_cast %62 : vector<1xf32> to vector<1x1xf32>
    %cst_23 = arith.constant 1.400000e+01 : f32
    %64 = vector.broadcast %cst_23 : f32 to vector<1x1xf32>
    %65 = arith.divf %63, %64 : vector<1x1xf32>
    %c1_i32_24 = arith.constant 1 : i32
    %66 = vector.broadcast %c1_i32_24 : i32 to vector<2x8xi32>
    %67 = arith.cmpi sge, %24, %66 : vector<2x8xi32>
    %c1_i32_25 = arith.constant 1 : i32
    %68 = tpu.dynamic_rotate %40 by %c1_i32_25 dim 1 : vector<2x8xf32>, i32 -> vector<2x8xf32>
    %cst_26 = arith.constant 1.000000e+00 : f32
    %69 = vector.broadcast %cst_26 : f32 to vector<2x8xf32>
    %70 = arith.select %67, %68, %69 : vector<2x8xi1>, vector<2x8xf32>
    %71 = arith.mulf %40, %70 : vector<2x8xf32>
    %c2_i32 = arith.constant 2 : i32
    %72 = vector.broadcast %c2_i32 : i32 to vector<2x8xi32>
    %73 = arith.cmpi sge, %24, %72 : vector<2x8xi32>
    %c2_i32_27 = arith.constant 2 : i32
    %74 = tpu.dynamic_rotate %71 by %c2_i32_27 dim 1 : vector<2x8xf32>, i32 -> vector<2x8xf32>
    %cst_28 = arith.constant 1.000000e+00 : f32
    %75 = vector.broadcast %cst_28 : f32 to vector<2x8xf32>
    %76 = arith.select %73, %74, %75 : vector<2x8xi1>, vector<2x8xf32>
    %77 = arith.mulf %71, %76 : vector<2x8xf32>
    %c4_i32 = arith.constant 4 : i32
    %78 = vector.broadcast %c4_i32 : i32 to vector<2x8xi32>
    %79 = arith.cmpi sge, %24, %78 : vector<2x8xi32>
    %c4_i32_29 = arith.constant 4 : i32
    %80 = tpu.dynamic_rotate %77 by %c4_i32_29 dim 1 : vector<2x8xf32>, i32 -> vector<2x8xf32>
    %cst_30 = arith.constant 1.000000e+00 : f32
    %81 = vector.broadcast %cst_30 : f32 to vector<2x8xf32>
    %82 = arith.select %79, %80, %81 : vector<2x8xi1>, vector<2x8xf32>
    %83 = arith.mulf %77, %82 : vector<2x8xf32>
    %c1_i32_31 = arith.constant 1 : i32
    %84 = vector.broadcast %c1_i32_31 : i32 to vector<2x8xi32>
    %85 = arith.cmpi sge, %24, %84 : vector<2x8xi32>
    %c1_i32_32 = arith.constant 1 : i32
    %86 = tpu.dynamic_rotate %83 by %c1_i32_32 dim 1 : vector<2x8xf32>, i32 -> vector<2x8xf32>
    %87 = arith.maximumf %83, %86 : vector<2x8xf32>
    %88 = arith.select %85, %87, %83 : vector<2x8xi1>, vector<2x8xf32>
    %c2_i32_33 = arith.constant 2 : i32
    %89 = vector.broadcast %c2_i32_33 : i32 to vector<2x8xi32>
    %90 = arith.cmpi sge, %24, %89 : vector<2x8xi32>
    %c2_i32_34 = arith.constant 2 : i32
    %91 = tpu.dynamic_rotate %88 by %c2_i32_34 dim 1 : vector<2x8xf32>, i32 -> vector<2x8xf32>
    %92 = arith.maximumf %88, %91 : vector<2x8xf32>
    %93 = arith.select %90, %92, %88 : vector<2x8xi1>, vector<2x8xf32>
    %c4_i32_35 = arith.constant 4 : i32
    %94 = vector.broadcast %c4_i32_35 : i32 to vector<2x8xi32>
    %95 = arith.cmpi sge, %24, %94 : vector<2x8xi32>
    %c4_i32_36 = arith.constant 4 : i32
    %96 = tpu.dynamic_rotate %93 by %c4_i32_36 dim 1 : vector<2x8xf32>, i32 -> vector<2x8xf32>
    %97 = arith.maximumf %93, %96 : vector<2x8xf32>
    %98 = arith.select %95, %97, %93 : vector<2x8xi1>, vector<2x8xf32>
    %99 = arith.divf %83, %98 : vector<2x8xf32>
    %cst_37 = arith.constant 1.000000e+00 : f32
    %100 = vector.broadcast %cst_37 : f32 to vector<2x8xf32>
    %101 = arith.subf %100, %99 : vector<2x8xf32>
    %cst_38 = arith.constant dense<0xFF800000> : vector<2xf32>
    %102 = vector.multi_reduction <maximumf>, %101, %cst_38 [1] : vector<2x8xf32> to vector<2xf32>
    %103 = vector.shape_cast %102 : vector<2xf32> to vector<2x1xf32>
    %cst_39 = arith.constant dense<0xFF800000> : vector<1xf32>
    %104 = vector.multi_reduction <maximumf>, %103, %cst_39 [0] : vector<2x1xf32> to vector<1xf32>
    %105 = vector.shape_cast %104 : vector<1xf32> to vector<1x1xf32>
    %106 = vector.extract_strided_slice %83 {offsets = [0, 7], sizes = [2, 1], strides = [1, 1]} : vector<2x8xf32> to vector<2x1xf32>
    %107 = vector.broadcast %105 : vector<1x1xf32> to vector<2x1xf32>
    %108 = arith.divf %106, %107 : vector<2x1xf32>
    %109 = vector.extract_strided_slice %83 {offsets = [1, 0], sizes = [1, 8], strides = [1, 1]} : vector<2x8xf32> to vector<1x8xf32>
    %110 = math.log %109 : vector<1x8xf32>
    %cst_40 = arith.constant 0.000000e+00 : f32
    %111 = vector.broadcast %cst_40 : f32 to vector<1x8xf32>
    %112 = arith.subf %111, %110 : vector<1x8xf32>
    %cst_41 = arith.constant dense<0.000000e+00> : vector<1xf32>
    %113 = vector.multi_reduction <add>, %112, %cst_41 [1] : vector<1x8xf32> to vector<1xf32>
    %114 = vector.shape_cast %113 : vector<1xf32> to vector<1x1xf32>
    %cst_42 = arith.constant dense<0.000000e+00> : vector<1xf32>
    %115 = vector.multi_reduction <add>, %114, %cst_42 [0] : vector<1x1xf32> to vector<1xf32>
    %116 = vector.shape_cast %115 : vector<1xf32> to vector<1x1xf32>
    %cst_43 = arith.constant 8.000000e+00 : f32
    %117 = vector.broadcast %cst_43 : f32 to vector<1x1xf32>
    %118 = arith.divf %116, %117 : vector<1x1xf32>
    %c0_44 = arith.constant 0 : index
    %c0_45 = arith.constant 0 : index
    %119 = vector.load %arg3[%c0_44, %c0_45] : memref<2x8xf32, #tpu.memory_space<vmem>>, vector<2x8xf32>
    tpu.vector_store %arg3[%c0_44, %c0_45], %83 {strides = array<i32>} : memref<2x8xf32, #tpu.memory_space<vmem>>, vector<2x8xf32>,
    %c0_46 = arith.constant 0 : index
    %c0_47 = arith.constant 0 : index
    %120 = vector.load %arg4[%c0_46, %c0_47] : memref<2x8xf32, #tpu.memory_space<vmem>>, vector<2x8xf32>
    tpu.vector_store %arg4[%c0_46, %c0_47], %40 {strides = array<i32>} : memref<2x8xf32, #tpu.memory_space<vmem>>, vector<2x8xf32>,
    %c0_48 = arith.constant 0 : index
    %c0_49 = arith.constant 0 : index
    %121 = vector.load %arg5[%c0_48, %c0_49] : memref<2x1xf32, #tpu.memory_space<vmem>>, vector<2x1xf32>
    tpu.vector_store %arg5[%c0_48, %c0_49], %108 {strides = array<i32>} : memref<2x1xf32, #tpu.memory_space<vmem>>, vector<2x1xf32>,
    %c0_50 = arith.constant 0 : index
    %c0_51 = arith.constant 0 : index
    %122 = vector.load %arg6[%c0_50, %c0_51] : memref<1x1xf32, #tpu.memory_space<vmem>>, vector<1x1xf32>
    tpu.vector_store %arg6[%c0_50, %c0_51], %59 {strides = array<i32>} : memref<1x1xf32, #tpu.memory_space<vmem>>, vector<1x1xf32>,
    %c0_52 = arith.constant 0 : index
    %c0_53 = arith.constant 0 : index
    %123 = vector.load %arg7[%c0_52, %c0_53] : memref<1x1xf32, #tpu.memory_space<vmem>>, vector<1x1xf32>
    tpu.vector_store %arg7[%c0_52, %c0_53], %65 {strides = array<i32>} : memref<1x1xf32, #tpu.memory_space<vmem>>, vector<1x1xf32>,
    %c0_54 = arith.constant 0 : index
    %c0_55 = arith.constant 0 : index
    %124 = vector.load %arg8[%c0_54, %c0_55] : memref<1x1xf32, #tpu.memory_space<vmem>>, vector<1x1xf32>
    tpu.vector_store %arg8[%c0_54, %c0_55], %118 {strides = array<i32>} : memref<1x1xf32, #tpu.memory_space<vmem>>, vector<1x1xf32>,
    return
  }
}

</mosaic_0001>

<llo_original>
// kernel: _test_loss_impl.1
$region0: #{_test_loss_impl.1}
  #allocation0 [shape = 'u32[]', space=smem, size = 0x4, offset = 0x4, fixed_abs, tag = 'smem constant byte address 0x4 - core index']
  #allocation1 [shape = 'u32[144,128]{1,0:T(1,128)}', space=vmem, size = 0x12000, scoped, tag = 'internal scratch']
  %s0 = inlined_call_operand.vmem [shape: f32[2], index: 0, kind: input, shape index: {}]
  %s1 = inlined_call_operand.vmem [shape: f32[2,5,8], index: 1, kind: input, shape index: {}]
  %s2 = inlined_call_operand.vmem [shape: f32[2,4,8], index: 2, kind: input, shape index: {}]
  %s3 = inlined_call_operand.hbm [shape: f32[2,8], index: 3, kind: output, shape index: {0}]
  %s4 = inlined_call_operand.vmem [shape: f32[2,8], index: 4, kind: output, shape index: {1}]
  %s5 = inlined_call_operand.vmem [shape: f32[2,1], index: 5, kind: output, shape index: {2}]
  %s6 = inlined_call_operand.hbm [shape: f32[1,1], index: 6, kind: output, shape index: {3}]
  %s7 = inlined_call_operand.hbm [shape: f32[1,1], index: 7, kind: output, shape index: {4}]
  %s8 = inlined_call_operand.hbm [shape: f32[1,1], index: 8, kind: output, shape index: {5}]
  %9 = xla_tuple %s3, %s4, %s5, %s6, %s7, %s8
  %s10 = sld [smem:[#allocation0]]
  $region66: #{_test_loss_impl.1} parent=0
    _
  %s12 = ssub.s32 1, %s10
  %s13 = scalar_select 0, %s12, %s10
  $region1: #{_test_loss_impl.1} parent=0
    #allocation2 [shape = 'u8[512]{0}', space=smem, size = 0x200, scoped, tag = 'input window, operand 0, single buffered']
    #allocation3 [shape = 's32[1]{0}', space=sflag, size = 0x4, scoped, tag = 'scoped memory for _test_loss_impl.1']
    #allocation4 [shape = 's32[1]{0}', space=sflag, size = 0x4, scoped, tag = 'scoped memory for _test_loss_impl.1']
    #allocation5 [shape = 'u8[1024]{0}', space=vmem, size = 0x400, scoped, tag = 'output window, operand 0, single buffered']
    #allocation6 [shape = 'u8[512]{0}', space=vmem, size = 0x400, scoped, tag = 'output window, operand 3, single buffered']
    #allocation7 [shape = 's32[1]{0}', space=sflag, size = 0x4, scoped, tag = 'scoped memory for _test_loss_impl.1']
    #allocation8 [shape = 'u8[512]{0}', space=vmem, size = 0x400, scoped, tag = 'output window, operand 4, single buffered']
    #allocation9 [shape = 'u8[512]{0}', space=vmem, size = 0x400, scoped, tag = 'output window, operand 5, single buffered']
    #allocation10 [shape = 's32[1]{0}', space=sflag, size = 0x4, scoped, tag = 'scoped memory for _test_loss_impl.1']
    %14 = vsyncpa [#allocation4], 0
    %15 = vsyncpa [#allocation3], 0
    %16 = vsyncpa [#allocation7], 0
    %17 = vsyncpa [#allocation10], 0
    // Predicated region
    $region2: #{_test_loss_impl.1} parent=1 // pred_check
      _
    $region3: #{_test_loss_impl.1} parent=1 // pred_check_branch
      %19 = sbr.rel (0) target = $region5
    $region4: #{_test_loss_impl.1} parent=1 // pred_region
      %s21 = ssub.s32 16, 16
      %22 = vsyncadd [#allocation4], %s21
      %s24 = sshll.u32 %s0, 4
      %s25 = int_to_ptr.vmem [resolvable:$true] %s24
      %27 = dma.vmem_to_smem %s25, 16, [#allocation2], [#allocation4]
    $region5: #{_test_loss_impl.1} parent=1 // pred_fallthru
      _
    // Predicated region
    $region6: #{_test_loss_impl.1} parent=1 // pred_check
      _
    $region7: #{_test_loss_impl.1} parent=1 // pred_check_branch
      %29 = sbr.rel (0) target = $region9
    $region8: #{_test_loss_impl.1} parent=1 // pred_region
      _
    $region9: #{_test_loss_impl.1} parent=1 // pred_fallthru
      _
    // Predicated region
    $region10: #{_test_loss_impl.1} parent=1 // pred_check
      _
    $region11: #{_test_loss_impl.1} parent=1 // pred_check_branch
      %31 = sbr.rel (0) target = $region13
    $region12: #{_test_loss_impl.1} parent=1 // pred_region
      _
    $region13: #{_test_loss_impl.1} parent=1 // pred_fallthru
      _
    // Predicated region
    $region14: #{_test_loss_impl.1} parent=1 // pred_check
      _
    $region15: #{_test_loss_impl.1} parent=1 // pred_check_branch
      %33 = sbr.rel (0) target = $region17
    $region16: #{_test_loss_impl.1} parent=1 // pred_region
      %34 = dma.done [#allocation4], 16
    $region17: #{_test_loss_impl.1} parent=1 // pred_fallthru
      _
    %35 = sfence
    %s36 = sld [smem:[#allocation2]]
    %s37 = sld [smem:[#allocation2 + $0x1]]
    %v38 = vld [vmem:[%s1] sm:$0x1f]
    %v39 = vld [vmem:[%s1 + $0x8] sm:$0x1f]
    %v40 = vld [vmem:[%s2] sm:$0xf]
    %v41 = vld [vmem:[%s2 + $0x4] sm:$0xf]
    %v44 = vrot.slane %v40, 7
    %v45 = vrot.slane %v41, 7
    %v48 = vmul.f32 %v38, %v44
    %v49 = vmul.f32 %v39, %v45
    %v52 = vrot.slane %v48, 1
    %v53 = vrot.slane %v49, 1
    %vm56 = vcmask 60416
    %v57 = vsel %vm56, %v52, 0.0
    %v58 = vrot.slane %v57, 4
    %v59 = vadd.f32 %v57, %v58
    %v60 = vrot.slane %v59, 2
    %v61 = vadd.f32 %v59, %v60
    %v62 = vrot.slane %v61, 1
    %v63 = vadd.f32 %v61, %v62
    %v64 = vsel %vm56, %v53, 0.0
    %v65 = vrot.slane %v64, 4
    %v66 = vadd.f32 %v64, %v65
    %v67 = vrot.slane %v66, 2
    %v68 = vadd.f32 %v66, %v67
    %v69 = vrot.slane %v68, 1
    %v70 = vadd.f32 %v68, %v69
    %v71 = vadd.f32 %v38, %v63
    %v72 = vadd.f32 %v39, %v70
    %v73 = vmin.f32 %v38, 0.0
    %v74 = vmin.f32 %v39, 0.0
    %v75 = vmin.f32 %v48, 0.0
    %v76 = vmin.f32 %v49, 0.0
    %v79 = vrot.slane %v75, 1
    %v80 = vrot.slane %v76, 1
    %v83 = vsel %vm56, %v79, 0.0
    %v84 = vrot.slane %v83, 4
    %v85 = vadd.f32 %v83, %v84
    %v86 = vrot.slane %v85, 2
    %v87 = vadd.f32 %v85, %v86
    %v88 = vrot.slane %v87, 1
    %v89 = vadd.f32 %v87, %v88
    %v90 = vsel %vm56, %v80, 0.0
    %v91 = vrot.slane %v90, 4
    %v92 = vadd.f32 %v90, %v91
    %v93 = vrot.slane %v92, 2
    %v94 = vadd.f32 %v92, %v93
    %v95 = vrot.slane %v94, 1
    %v96 = vadd.f32 %v94, %v95
    %v97 = vadd.f32 %v73, %v89
    %v98 = vadd.f32 %v74, %v96
    %v99 = vstv %s37
    %v100 = vmul.f32 %v97, %v99
    %v101 = vmul.f32 %v98, %v99
    %v102 = vrcp.pop %v71
    %v103 = vmul.f32 %v38, %v102
    %v104 = vrcp.pop %v72
    %v105 = vmul.f32 %v39, %v104
    %v106 = vlaneseq
    %v107 = vshrl.u32 %v106, 7
    %v108 = vsub.s32 0, %v107
    %v109 = vrot.slane %v71, %v108
    %v110 = vlaneseq
    %v111 = vshrl.u32 %v110, 7
    %v112 = vsub.s32 0, %v111
    %v113 = vrot.slane %v72, %v112
    %v114 = vrcp.pop %v109
    %v115 = vmul.f32 %v48, %v114
    %v116 = vrcp.pop %v113
    %v117 = vmul.f32 %v49, %v116
    %v120 = vrot.slane %v105, 7
    %vm121 = vcmask 1041409
    %v122 = vsel %vm121, %v120, %v103
    %vm124 = vcmask 1047616
    %125 = vrot.lane.b32.xlu0 %v122, 8
    %v126 = vpop.permute.xlu0 %125
    %v127 = vsel %vm124, %v126, %v122
    %128 = vrot.lane.b32.xlu0 %v127, 8
    %v129 = vpop.permute.xlu0 %128
    %v130 = vsel %vm124, %v129, %v122
    %v133 = vrot.slane %v115, 1
    %v134 = vrot.slane %v117, 1
    %137 = vrot.lane.b32.xlu0 %v133, 8
    %v138 = vpop.permute.xlu0 %137
    %v139 = vsel %vm124, %v138, %v133
    %140 = vrot.lane.b32.xlu0 %v134, 8
    %v141 = vpop.permute.xlu0 %140
    %v142 = vsel %vm124, %v141, %v134
    %143 = vrot.lane.b32.xlu0 %v139, 8
    %v144 = vpop.permute.xlu0 %143
    %145 = vrot.lane.b32.xlu0 %v142, 8
    %v146 = vpop.permute.xlu0 %145
    %v147 = vsel %vm124, %v144, %v133
    %v148 = vsel %vm124, %v146, %v134
    %v149 = vlaneseq
    %v150 = vand.u32 %v149, 127
    %v153 = vrot.slane %v39, 7
    %v154 = vsel %vm121, %v153, %v38
    %155 = vrot.lane.b32.xlu0 %v154, 7
    %v156 = vpop.permute.xlu0 %155
    %v158 = vsub.f32 %v130, %v156
    %v159 = vand.u32 2147483647, %v158
    %v160 = vrot.slane %v38, 1
    %v161 = vrot.slane %v39, 1
    %162 = vrot.lane.b32.xlu0 %v160, 7
    %v163 = vpop.permute.xlu0 %162
    %164 = vrot.lane.b32.xlu0 %v161, 7
    %v165 = vpop.permute.xlu0 %164
    %v168 = vsub.f32 %v147, %v163
    %v169 = vsub.f32 %v148, %v165
    %v170 = vand.u32 2147483647, %v168
    %v171 = vand.u32 2147483647, %v169
    %vm172 = vcmask 117816
    %v173 = vsel %vm172, %v170, 0.0
    %v174 = vrot.slane %v173, 4
    %v175 = vadd.f32 %v173, %v174
    %v176 = vrot.slane %v175, 2
    %v177 = vadd.f32 %v175, %v176
    %v178 = vrot.slane %v177, 1
    %v179 = vadd.f32 %v177, %v178
    %v180 = vsel %vm172, %v171, 0.0
    %v181 = vrot.slane %v180, 4
    %v182 = vadd.f32 %v180, %v181
    %v183 = vrot.slane %v182, 2
    %v184 = vadd.f32 %v182, %v183
    %v185 = vrot.slane %v184, 1
    %v186 = vadd.f32 %v184, %v185
    %v189 = vsel %vm121, %v186, %v179
    %v191 = vadd.f32 %v159, %v189
    %vm192 = vcmp.ge.s32.totalorder %v150, 1
    %194 = vrot.lane.b32.xlu0 %v191, 121
    %v195 = vpop.permute.xlu0 %194
    %v197 = vsel %vm192, %v195, 0.0
    %v198 = vstv %s36
    %v199 = vmul.f32 %v197, %v198
    %v200 = vsub.f32 1.0, %v199
    %v202 = vrot.slane %v200, 1
    %v205 = vmul.f32 %v71, %v200
    %v206 = vmul.f32 %v72, %v202
    %v207 = vadd.f32 %v205, %v100
    %v208 = vadd.f32 %v206, %v101
    %v209 = vsub.f32 %v207, 1.0
    %v210 = vsub.f32 %v208, 1.0
    %v213 = vrot.slane %v210, 7
    %v214 = vsel %vm121, %v213, %v209
    %vm216 = vcmask 58368
    %v217 = vsel %vm216, %v214, 0.0
    %218 = vadd.xlane.f32.xlu0 %v217
    %v219 = vpop.xlane.xlu0 %218
    %vm220 = vcmask 1041408
    %v221 = vsel %vm220, %v219, 0.0
    %v222 = vrot.slane %v221, 4
    %v223 = vadd.f32 %v221, %v222
    %v224 = vrot.slane %v223, 2
    %v225 = vadd.f32 %v223, %v224
    %v226 = vrot.slane %v225, 1
    %v227 = vadd.f32 %v225, %v226
    %v228 = vrcp.pop 16.0
    %v229 = vmul.f32 %v227, %v228
    %v230 = vsub.f32 %v209, %v229
    %v231 = vsub.f32 %v210, %v229
    %v232 = vmul.f32 %v230, %v230
    %v233 = vmul.f32 %v231, %v231
    %v236 = vrot.slane %v233, 7
    %v237 = vsel %vm121, %v236, %v232
    %v239 = vsel %vm216, %v237, 0.0
    %240 = vadd.xlane.f32.xlu0 %v239
    %v241 = vpop.xlane.xlu0 %240
    %v242 = vsel %vm220, %v241, 0.0
    %v243 = vrot.slane %v242, 4
    %v244 = vadd.f32 %v242, %v243
    %v245 = vrot.slane %v244, 2
    %v246 = vadd.f32 %v244, %v245
    %v247 = vrot.slane %v246, 1
    %v248 = vadd.f32 %v246, %v247
    %v249 = vrcp.pop 15.0
    %v250 = vmul.f32 %v248, %v249
    %v251 = vrsqrt.pop %v250
    %v252 = vmul.f32 %v250, %v251
    %vm253 = vcmp.eq.f32.partialorder %v250, inf
    %v254 = vsel %vm253, %v250, %v252
    %vm255 = vcmp.eq.f32.partialorder %v250, 0.0
    %v256 = vand.u32 %v250, 2147483648
    %v257 = vsel %vm255, %v256, %v254
    %v258 = vrcp.pop %v257
    %v259 = vmul.f32 %v229, %v258
    %v260 = vsel %vm216, %v197, 0.0
    %261 = vadd.xlane.f32.xlu0 %v260
    %v262 = vpop.xlane.xlu0 %261
    %v263 = vsel %vm220, %v262, 0.0
    %v264 = vrot.slane %v263, 4
    %v265 = vadd.f32 %v263, %v264
    %v266 = vrot.slane %v265, 2
    %v267 = vadd.f32 %v265, %v266
    %v268 = vrot.slane %v267, 1
    %v269 = vadd.f32 %v267, %v268
    %v270 = vrcp.pop 14.0
    %v271 = vmul.f32 %v269, %v270
    %v274 = vrot.slane %v208, 7
    %v275 = vsel %vm121, %v274, %v207
    %277 = vrot.lane.b32.xlu0 %v275, 8
    %v278 = vpop.permute.xlu0 %277
    %v279 = vsel %vm124, %v278, %v275
    %280 = vrot.lane.b32.xlu0 %v279, 8
    %v281 = vpop.permute.xlu0 %280
    %v282 = vsel %vm124, %v281, %v275
    %284 = vrot.lane.b32.xlu0 %v282, 121
    %v285 = vpop.permute.xlu0 %284
    %v287 = vsel %vm192, %v285, 1.0
    %v289 = vrot.slane %v287, 1
    %v292 = vmul.f32 %v207, %v287
    %v293 = vmul.f32 %v208, %v289
    %vm294 = vcmp.ge.s32.totalorder %v150, 2
    %v297 = vrot.slane %v293, 7
    %v298 = vsel %vm121, %v297, %v292
    %300 = vrot.lane.b32.xlu0 %v298, 8
    %v301 = vpop.permute.xlu0 %300
    %v302 = vsel %vm124, %v301, %v298
    %303 = vrot.lane.b32.xlu0 %v302, 8
    %v304 = vpop.permute.xlu0 %303
    %v305 = vsel %vm124, %v304, %v298
    %307 = vrot.lane.b32.xlu0 %v305, 122
    %v308 = vpop.permute.xlu0 %307
    %v310 = vsel %vm294, %v308, 1.0
    %v312 = vrot.slane %v310, 1
    %v315 = vmul.f32 %v292, %v310
    %v316 = vmul.f32 %v293, %v312
    %vm317 = vcmp.ge.s32.totalorder %v150, 4
    %v320 = vrot.slane %v316, 7
    %v321 = vsel %vm121, %v320, %v315
    %323 = vrot.lane.b32.xlu0 %v321, 8
    %v324 = vpop.permute.xlu0 %323
    %v325 = vsel %vm124, %v324, %v321
    %326 = vrot.lane.b32.xlu0 %v325, 8
    %v327 = vpop.permute.xlu0 %326
    %v328 = vsel %vm124, %v327, %v321
    %330 = vrot.lane.b32.xlu0 %v328, 124
    %v331 = vpop.permute.xlu0 %330
    %v333 = vsel %vm317, %v331, 1.0
    %v335 = vrot.slane %v333, 1
    %v338 = vmul.f32 %v315, %v333
    %v339 = vmul.f32 %v316, %v335
    %v342 = vrot.slane %v339, 7
    %v343 = vsel %vm121, %v342, %v338
    %345 = vrot.lane.b32.xlu0 %v343, 8
    %v346 = vpop.permute.xlu0 %345
    %v347 = vsel %vm124, %v346, %v343
    %348 = vrot.lane.b32.xlu0 %v347, 8
    %v349 = vpop.permute.xlu0 %348
    %v350 = vsel %vm124, %v349, %v343
    %v352 = vrot.slane %v350, 1
    %353 = vrot.lane.b32.xlu0 %v350, 121
    %v354 = vpop.permute.xlu0 %353
    %355 = vrot.lane.b32.xlu0 %v352, 121
    %v356 = vpop.permute.xlu0 %355
    %v359 = vmax.f32 %v338, %v354
    %v360 = vmax.f32 %v339, %v356
    %v363 = vrot.slane %v360, 7
    %v364 = vsel %vm121, %v363, %v359
    %v366 = vsel %vm192, %v364, %v343
    %367 = vrot.lane.b32.xlu0 %v366, 8
    %v368 = vpop.permute.xlu0 %367
    %v369 = vsel %vm124, %v368, %v366
    %370 = vrot.lane.b32.xlu0 %v369, 8
    %v371 = vpop.permute.xlu0 %370
    %v372 = vsel %vm124, %v371, %v366
    %374 = vrot.lane.b32.xlu0 %v372, 122
    %v375 = vpop.permute.xlu0 %374
    %v377 = vmax.f32 %v366, %v375
    %v378 = vsel %vm294, %v377, %v366
    %379 = vrot.lane.b32.xlu0 %v378, 8
    %v380 = vpop.permute.xlu0 %379
    %v381 = vsel %vm124, %v380, %v378
    %382 = vrot.lane.b32.xlu0 %v381, 8
    %v383 = vpop.permute.xlu0 %382
    %v384 = vsel %vm124, %v383, %v378
    %386 = vrot.lane.b32.xlu0 %v384, 124
    %v387 = vpop.permute.xlu0 %386
    %v389 = vmax.f32 %v378, %v387
    %v390 = vsel %vm317, %v389, %v378
    %v392 = vrot.slane %v390, 1
    %v395 = vrcp.pop %v390
    %v396 = vmul.f32 %v338, %v395
    %v397 = vrcp.pop %v392
    %v398 = vmul.f32 %v339, %v397
    %v399 = vsub.f32 1.0, %v396
    %v400 = vsub.f32 1.0, %v398
    %v403 = vrot.slane %v400, 7
    %v404 = vsel %vm121, %v403, %v399
    %v406 = vsel %vm216, %v404, -inf
    %407 = vmax.xlane.f32.xlu0 %v406
    %v408 = vpop.xlane.xlu0 %407
    %v409 = vsel %vm220, %v408, -inf
    %v410 = vrot.slane %v409, 4
    %v411 = vmax.f32 %v409, %v410
    %v412 = vrot.slane %v411, 2
    %v413 = vmax.f32 %v411, %v412
    %v414 = vrot.slane %v413, 1
    %v415 = vmax.f32 %v413, %v414
    %v416 = vrcp.pop %v415
    %v417 = vmul.f32 %v338, %v416
    %v418 = vmul.f32 %v339, %v416
    %v419 = vlog2.pop %v339
    %v420 = vmul.f32 %v419, 0.6931472
    %v421 = vsub.f32 0.0, %v420
    %vm422 = vcmask 57344
    %v423 = vsel %vm422, %v421, 0.0
    %424 = vadd.xlane.f32.xlu0 %v423
    %v425 = vpop.xlane.xlu0 %424
    %v426 = vadd.f32 %v425, 0.0
    %v427 = vrcp.pop 8.0
    %v428 = vmul.f32 %v426, %v427
    %429 = vst.msk [vmem:[#allocation5] sm:$0x3] %vm216, %v343
    %430 = vst.msk [vmem:[%s4] sm:$0x3] %vm216, %v275
    %v433 = vrot.slane %v418, 7
    %v434 = vsel %vm121, %v433, %v417
    %435 = vrot.lane.b32.xlu0 %v434, 121
    %v436 = vpop.permute.xlu0 %435
    %vm438 = vcmask 1024
    %439 = vst.msk [vmem:[%s5] sm:$0x3] %vm438, %v436
    %vm440 = vcmask 0
    %441 = vst.msk [vmem:[#allocation6] sm:$0x1] %vm440, %v259
    %442 = vst.msk [vmem:[#allocation8] sm:$0x1] %vm440, %v271
    %443 = vst.msk [vmem:[#allocation9] sm:$0x1] %vm440, %v428
    // Predicated region
    $region18: #{_test_loss_impl.1} parent=1 // pred_check
      _
    $region19: #{_test_loss_impl.1} parent=1 // pred_check_branch
      %445 = sbr.rel (0) target = $region21
    $region20: #{_test_loss_impl.1} parent=1 // pred_region
      %s447 = ssub.s32 32, 32
      %448 = vsyncadd [#allocation3], %s447
      %s450 = sshll.u32 [#allocation5], 4
      %s451 = int_to_ptr.vmem [resolvable:$true] %s450
      %453 = dma.vmem_to_hbm [thread:$0]  %s451, 32, %s3, [#allocation3]
    $region21: #{_test_loss_impl.1} parent=1 // pred_fallthru
      _
    // Predicated region
    $region22: #{_test_loss_impl.1} parent=1 // pred_check
      _
    $region23: #{_test_loss_impl.1} parent=1 // pred_check_branch
      %455 = sbr.rel (0) target = $region25
    $region24: #{_test_loss_impl.1} parent=1 // pred_region
      _
    $region25: #{_test_loss_impl.1} parent=1 // pred_fallthru
      _
    // Predicated region
    $region26: #{_test_loss_impl.1} parent=1 // pred_check
      _
    $region27: #{_test_loss_impl.1} parent=1 // pred_check_branch
      %457 = sbr.rel (0) target = $region29
    $region28: #{_test_loss_impl.1} parent=1 // pred_region
      _
    $region29: #{_test_loss_impl.1} parent=1 // pred_fallthru
      _
    // Predicated region
    $region30: #{_test_loss_impl.1} parent=1 // pred_check
      _
    $region31: #{_test_loss_impl.1} parent=1 // pred_check_branch
      %459 = sbr.rel (0) target = $region33
    $region32: #{_test_loss_impl.1} parent=1 // pred_region
      %s461 = ssub.s32 16, 16
      %462 = vsyncadd [#allocation7], %s461
      %s464 = sshll.u32 [#allocation6], 4
      %s465 = int_to_ptr.vmem [resolvable:$true] %s464
      %467 = dma.vmem_to_hbm [thread:$0]  %s465, 16, %s6, [#allocation7]
    $region33: #{_test_loss_impl.1} parent=1 // pred_fallthru
      _
    // Predicated region
    $region34: #{_test_loss_impl.1} parent=1 // pred_check
      _
    $region35: #{_test_loss_impl.1} parent=1 // pred_check_branch
      %469 = sbr.rel (0) target = $region37
    $region36: #{_test_loss_impl.1} parent=1 // pred_region
      %s471 = ssub.s32 16, 16
      %472 = vsyncadd [#allocation7], %s471
      %s474 = sshll.u32 [#allocation8], 4
      %s475 = int_to_ptr.vmem [resolvable:$true] %s474
      %477 = dma.vmem_to_hbm [thread:$0]  %s475, 16, %s7, [#allocation7]
    $region37: #{_test_loss_impl.1} parent=1 // pred_fallthru
      _
    // Predicated region
    $region38: #{_test_loss_impl.1} parent=1 // pred_check
      _
    $region39: #{_test_loss_impl.1} parent=1 // pred_check_branch
      %479 = sbr.rel (0) target = $region41
    $region40: #{_test_loss_impl.1} parent=1 // pred_region
      %s481 = ssub.s32 16, 16
      %482 = vsyncadd [#allocation10], %s481
      %s484 = sshll.u32 [#allocation9], 4
      %s485 = int_to_ptr.vmem [resolvable:$true] %s484
      %487 = dma.vmem_to_hbm [thread:$0]  %s485, 16, %s8, [#allocation10]
    $region41: #{_test_loss_impl.1} parent=1 // pred_fallthru
      _
    // Predicated region
    $region42: #{_test_loss_impl.1} parent=1 // pred_check
      _
    $region43: #{_test_loss_impl.1} parent=1 // pred_check_branch
      %489 = sbr.rel (0) target = $region45
    $region44: #{_test_loss_impl.1} parent=1 // pred_region
      %490 = dma.done [#allocation3], 32
    $region45: #{_test_loss_impl.1} parent=1 // pred_fallthru
      _
    // Predicated region
    $region46: #{_test_loss_impl.1} parent=1 // pred_check
      _
    $region47: #{_test_loss_impl.1} parent=1 // pred_check_branch
      %492 = sbr.rel (0) target = $region49
    $region48: #{_test_loss_impl.1} parent=1 // pred_region
      _
    $region49: #{_test_loss_impl.1} parent=1 // pred_fallthru
      _
    // Predicated region
    $region50: #{_test_loss_impl.1} parent=1 // pred_check
      _
    $region51: #{_test_loss_impl.1} parent=1 // pred_check_branch
      %494 = sbr.rel (0) target = $region53
    $region52: #{_test_loss_impl.1} parent=1 // pred_region
      _
    $region53: #{_test_loss_impl.1} parent=1 // pred_fallthru
      _
    // Predicated region
    $region54: #{_test_loss_impl.1} parent=1 // pred_check
      _
    $region55: #{_test_loss_impl.1} parent=1 // pred_check_branch
      %496 = sbr.rel (0) target = $region57
    $region56: #{_test_loss_impl.1} parent=1 // pred_region
      %497 = dma.done [#allocation7], 16
    $region57: #{_test_loss_impl.1} parent=1 // pred_fallthru
      _
    // Predicated region
    $region58: #{_test_loss_impl.1} parent=1 // pred_check
      _
    $region59: #{_test_loss_impl.1} parent=1 // pred_check_branch
      %499 = sbr.rel (0) target = $region61
    $region60: #{_test_loss_impl.1} parent=1 // pred_region
      %500 = dma.done [#allocation7], 16
    $region61: #{_test_loss_impl.1} parent=1 // pred_fallthru
      _
    // Predicated region
    $region62: #{_test_loss_impl.1} parent=1 // pred_check
      _
    $region63: #{_test_loss_impl.1} parent=1 // pred_check_branch
      %502 = sbr.rel (0) target = $region65
    $region64: #{_test_loss_impl.1} parent=1 // pred_region
      %503 = dma.done [#allocation10], 16
    $region65: #{_test_loss_impl.1} parent=1 // pred_fallthru
      _
    %504 = vsyncpa [#allocation3], 1
    %505 = vsyncpa [#allocation7], 1
    %506 = vsyncpa [#allocation10], 1
    %507 = vsyncpa [#allocation4], 1

</llo_original>
